<compile_context>
chip_gen: v5e
topology: v5e:2x2
jax: 0.10.0
libtpu: 0.0.40
codegen_flags: <defaults>
</compile_context>

<pallas_src>
import functools

import jax
import jax.numpy as jnp
from jax.experimental import pallas as pl
from jax.experimental.pallas import tpu as pltpu

_LANE = 128
_NEG = 1e9   # additive-mask magnitude (f32/bf16-safe; do NOT use 1e30 in bf16)


def _round_up(v, m):
    return (v + m - 1) // m * m


def _elu(x):
    return jnp.where(x > 0.0, x, jnp.exp(jnp.minimum(x, 0.0)) - 1.0)


def _gat_stack_kernel(*refs, layer_cfgs, negative_slope=0.2):
    """All GATConv layers fused; activations live in VMEM between layers."""
    num_layers = len(layer_cfgs)
    x_ref, neg_ref = refs[0], refs[1]
    param_refs = refs[2:2 + 3 * num_layers]          # (w, att_mat, bias) per layer
    out_ref = refs[2 + 3 * num_layers]
    buf = refs[3 + 3 * num_layers]                   # VMEM scratch for inter-layer x

    neg = neg_ref[...].astype(jnp.float32)           # [N,N]: 0 on edges, -1e9 otherwise
    x = x_ref[...].astype(jnp.float32)               # [N, F0]

    for li, cfg in enumerate(layer_cfgs):
        heads, c = cfg["heads"], cfg["out_channels"]
        concat, apply_elu = cfg["concat"], cfg["apply_elu"]
        w_ref, att_ref, bias_ref = param_refs[3 * li:3 * li + 3]
        last = li == num_layers - 1
        tgt = out_ref if last else buf

        # TODO(synk): F.dropout between layers is identity here (eval / training=False).

        # Feature transform (MXU, bf16 operands, f32 accumulate): [N, H*C]
        xw = jnp.dot(x.astype(jnp.bfloat16), w_ref[...],
                     preferred_element_type=jnp.float32)

        # All heads' attention scores in one MXU matmul against a block-diagonal
        # [H*C, 2H] matrix: scores[:, h] = <xw_h, att_dst_h>, scores[:, H+h] = <xw_h, att_src_h>
        scores = jnp.dot(xw, att_ref[...], preferred_element_type=jnp.float32)  # [N, 2H]
        src_t = scores[:, heads:2 * heads].T          # [H, N] — one tiny transpose/layer

        acc = None
        for h in range(heads):
            # logits e[dst, src] = LeakyReLU(a_dst[dst] + a_src[src]); additive mask.
            e = scores[:, h:h + 1] + src_t[h:h + 1, :]            # [N, N]
            e = jnp.where(e > 0.0, e, negative_slope * e)         # LeakyReLU(0.2)
            e = e + neg                                           # mask non-edges
            m = jnp.max(e, axis=-1, keepdims=True)
            p = jnp.exp(e - m)                                    # masked -> exactly 0
            alpha = p * pl.reciprocal(jnp.sum(p, axis=-1, keepdims=True), approx=True)

            xw_h = xw[:, h * c:(h + 1) * c]
            o_h = jnp.dot(alpha.astype(jnp.bfloat16), xw_h.astype(jnp.bfloat16),
                          preferred_element_type=jnp.float32)     # [N, C]

            if concat:
                o_h = o_h + bias_ref[0:1, h * c:(h + 1) * c]
                if apply_elu:
                    o_h = _elu(o_h)
                tgt[:, h * c:(h + 1) * c] = o_h                   # direct slice store
            else:
                acc = o_h if acc is None else acc + o_h

        if concat:
            width = heads * c
        else:
            o = acc * (1.0 / heads) + bias_ref[0:1, :]            # mean over heads
            if apply_elu:
                o = _elu(o)
            tgt[:, 0:c] = o
            width = c

        if not last:
            x = tgt[:, 0:width]                                   # stays in VMEM


def _block_att_mat(att_src, att_dst):
    """Block-diagonal [H*C, 2H]: cols 0..H-1 -> dst scores, cols H..2H-1 -> src scores."""
    h, c = att_src.shape
    m = jnp.zeros((h * c, 2 * h), jnp.float32)
    for i in range(h):
        m = m.at[i * c:(i + 1) * c, i].set(att_dst[i])
        m = m.at[i * c:(i + 1) * c, h + i].set(att_src[i])
    return m


def init_gat_layer(key, in_dim, out_channels, heads, concat, apply_elu, pad_to=None):
    """Glorot-style init matching PyG GATConv shapes; optional channel zero-padding."""
    k1, k2, k3 = jax.random.split(key, 3)
    c = out_channels
    lim_w = (6.0 / (in_dim + heads * c)) ** 0.5
    w = jax.random.uniform(k1, (in_dim, heads * c), jnp.float32, -lim_w, lim_w)
    lim_a = (6.0 / (c + 1)) ** 0.5
    att_src = jax.random.uniform(k2, (heads, c), jnp.float32, -lim_a, lim_a)
    att_dst = jax.random.uniform(k3, (heads, c), jnp.float32, -lim_a, lim_a)

    c_pad = c if pad_to is None else max(pad_to, c)
    if c_pad != c:
        # zero-pad each head's channel block -> lane-dense output, padded cols are 0.
        w_p = jnp.zeros((in_dim, heads * c_pad), jnp.float32)
        a_s = jnp.zeros((heads, c_pad), jnp.float32)
        a_d = jnp.zeros((heads, c_pad), jnp.float32)
        for hh in range(heads):
            w_p = w_p.at[:, hh * c_pad:hh * c_pad + c].set(w[:, hh * c:(hh + 1) * c])
            a_s = a_s.at[hh, :c].set(att_src[hh])
            a_d = a_d.at[hh, :c].set(att_dst[hh])
        w, att_src, att_dst, c = w_p, a_s, a_d, c_pad

    bias_dim = heads * c if concat else c
    params = dict(w=w.astype(jnp.bfloat16),                  # bf16 MXU operand, half DMA
                  att=_block_att_mat(att_src, att_dst),      # f32 score matmul
                  bias=jnp.zeros((1, bias_dim), jnp.float32))
    cfg = dict(heads=heads, out_channels=c, concat=concat, apply_elu=apply_elu)
    return params, cfg


def build_gat(key, in_size, hidden_size, num_layers, out_size,
              num_heads=1, num_out_heads=1):
    """Mirrors the GAT layer structure used by GATWrapper (no norm, ELU between layers)."""
    out_pad = _round_up(max(out_size, 1), _LANE)
    keys = jax.random.split(key, max(num_layers, 1))
    layers = []
    if num_layers == 1:
        layers.append(init_gat_layer(keys[0], in_size, out_size, num_out_heads,
                                     concat=False, apply_elu=False, pad_to=out_pad))
        return layers
    layers.append(init_gat_layer(keys[0], in_size, hidden_size, num_heads,
                                 concat=True, apply_elu=True))
    for li in range(num_layers - 2):
        layers.append(init_gat_layer(keys[1 + li], hidden_size * num_heads, hidden_size,
                                     num_heads, concat=True, apply_elu=True))
    layers.append(init_gat_layer(keys[num_layers - 1], hidden_size * num_heads, out_size,
                                 num_out_heads, concat=False, apply_elu=False,
                                 pad_to=out_pad))
    return layers


def gat_forward(x, edge_index, layers, out_size):
    n = x.shape[0]
    num_layers = len(layers)

    # Dense adjacency mask adj[dst, src] with self loops (PyG add_self_loops=True).
    # TODO(synk): densification collapses duplicate edges / pre-existing self-loops.
    src, dst = edge_index[0], edge_index[1]
    adj = jnp.zeros((n, n), jnp.float32).at[dst, src].set(1.0)
    diag = jnp.arange(n)
    adj = adj.at[diag, diag].set(1.0)
    neg_mask = ((adj - 1.0) * _NEG).astype(jnp.bfloat16)     # 0 on edges, -1e9 elsewhere

    args = [x.astype(jnp.float32), neg_mask]
    for p, _ in layers:
        args += [p["w"], p["att"], p["bias"]]

    cfgs = [c for _, c in layers]
    last = cfgs[-1]
    out_cols = last["out_channels"] * (last["heads"] if last["concat"] else 1)
    inter_widths = [c["heads"] * c["out_channels"] if c["concat"] else c["out_channels"]
                    for c in cfgs[:-1]]
    inter_cols = _round_up(max(inter_widths + [_LANE]), _LANE)

    # Advisory cost estimate for XLA scheduling.
    flops, trans = 0, 0
    bytes_acc = x.nbytes + neg_mask.nbytes + n * out_cols * 4
    for p, c in layers:
        din, dout = p["w"].shape
        h, ch = c["heads"], c["out_channels"]
        flops += 2 * n * din * dout + 2 * n * dout * 2 * h + h * 2 * n * n * ch
        flops += h * 6 * n * n
        trans += h * (n * n + n)
        bytes_acc += p["w"].nbytes + p["att"].nbytes + p["bias"].nbytes

    kernel = functools.partial(_gat_stack_kernel, layer_cfgs=cfgs)
    vmem = pl.BlockSpec(memory_space=pltpu.MemorySpace.VMEM)

    out = pl.pallas_call(
        kernel,
        out_shape=jax.ShapeDtypeStruct((n, out_cols), jnp.float32),
        in_specs=[vmem] * len(args),
        out_specs=vmem,
        scratch_shapes=[pltpu.VMEM((n, inter_cols), jnp.float32)],
        compiler_params=pltpu.CompilerParams(vmem_limit_bytes=64 * 1024 * 1024),
        cost_estimate=pl.CostEstimate(flops=int(flops), transcendentals=int(trans),
                                      bytes_accessed=int(bytes_acc)),
    )(*args)
    return out[:, :out_size]                                  # drop lane padding


if __name__ == "__main__":
    # Small deterministic problem consistent with GATWrapper(in, hidden, layers, out, p).
    N, E = 32, 96
    in_size, hidden, num_layers, out_size = 16, 32, 2, 8
    num_heads, num_out_heads = 2, 1

    key = jax.random.PRNGKey(0)
    k_x, k_src, k_dst, k_params = jax.random.split(key, 4)

    x = jax.random.normal(k_x, (N, in_size), jnp.float32)
    edge_index = jnp.stack([
        jax.random.randint(k_src, (E,), 0, N),
        jax.random.randint(k_dst, (E,), 0, N),
    ], axis=0)                                                # [2, E]

    layers = build_gat(k_params, in_size, hidden, num_layers, out_size,
                       num_heads=num_heads, num_out_heads=num_out_heads)

    out = gat_forward(x, edge_index, layers, out_size)
    out = jax.block_until_ready(out)

    assert out.shape == (N, out_size), out.shape
    assert bool(jnp.all(jnp.isfinite(out)))
    print("KERNEL_OK")
</pallas_src>

<mosaic_0001>
module attributes {stable_mosaic.version = 11 : i64} {
  func.func @_gat_stack_kernel(%arg0: memref<32x16xf32, #tpu.memory_space<vmem>>, %arg1: memref<32x32xbf16, #tpu.memory_space<vmem>>, %arg2: memref<16x64xbf16, #tpu.memory_space<vmem>>, %arg3: memref<64x4xf32, #tpu.memory_space<vmem>>, %arg4: memref<1x64xf32, #tpu.memory_space<vmem>>, %arg5: memref<64x128xbf16, #tpu.memory_space<vmem>>, %arg6: memref<128x2xf32, #tpu.memory_space<vmem>>, %arg7: memref<1x128xf32, #tpu.memory_space<vmem>>, %arg8: memref<32x128xf32, #tpu.memory_space<vmem>>, %arg9: memref<32x128xf32, #tpu.memory_space<vmem>>) attributes {dimension_semantics = [], scalar_prefetch = 0 : i64, scratch_operands = 1 : i64, tpu.core_type = #tpu.core_type<tc>} {
    %c0 = arith.constant 0 : index
    %c0_0 = arith.constant 0 : index
    %0 = vector.load %arg1[%c0, %c0_0] : memref<32x32xbf16, #tpu.memory_space<vmem>>, vector<32x32xbf16>
    %1 = arith.extf %0 : vector<32x32xbf16> to vector<32x32xf32>
    %c0_1 = arith.constant 0 : index
    %c0_2 = arith.constant 0 : index
    %2 = vector.load %arg0[%c0_1, %c0_2] : memref<32x16xf32, #tpu.memory_space<vmem>>, vector<32x16xf32>
    %3 = arith.truncf %2 : vector<32x16xf32> to vector<32x16xbf16>
    %c0_3 = arith.constant 0 : index
    %c0_4 = arith.constant 0 : index
    %4 = vector.load %arg2[%c0_3, %c0_4] : memref<16x64xbf16, #tpu.memory_space<vmem>>, vector<16x64xbf16>
    %cst = arith.constant dense<0.000000e+00> : vector<32x64xf32>
    %5 = tpu.matmul %3, %4, %cst {dimension_numbers = #tpu.dot_dimension_numbers<[1], [0], [0], [1], [0, 0, 1, 1], [], []>} : vector<32x16xbf16>, vector<16x64xbf16>, vector<32x64xf32> -> vector<32x64xf32>
    %c0_5 = arith.constant 0 : index
    %c0_6 = arith.constant 0 : index
    %6 = vector.load %arg3[%c0_5, %c0_6] : memref<64x4xf32, #tpu.memory_space<vmem>>, vector<64x4xf32>
    %cst_7 = arith.constant dense<0.000000e+00> : vector<32x4xf32>
    %7 = tpu.matmul %5, %6, %cst_7 {dimension_numbers = #tpu.dot_dimension_numbers<[1], [0], [0], [1], [0, 0, 1, 1], [], []>} : vector<32x64xf32>, vector<64x4xf32>, vector<32x4xf32> -> vector<32x4xf32>
    %8 = vector.extract_strided_slice %7 {offsets = [0, 2], sizes = [32, 2], strides = [1, 1]} : vector<32x4xf32> to vector<32x2xf32>
    %9 = tpu.transpose %8, [1, 0] : vector<32x2xf32> -> vector<2x32xf32>
    %10 = vector.extract_strided_slice %7 {offsets = [0, 0], sizes = [32, 1], strides = [1, 1]} : vector<32x4xf32> to vector<32x1xf32>
    %11 = vector.extract_strided_slice %9 {offsets = [0, 0], sizes = [1, 32], strides = [1, 1]} : vector<2x32xf32> to vector<1x32xf32>
    %12 = vector.broadcast %10 : vector<32x1xf32> to vector<32x32xf32>
    %13 = vector.broadcast %11 : vector<1x32xf32> to vector<32x32xf32>
    %14 = arith.addf %12, %13 : vector<32x32xf32>
    %cst_8 = arith.constant 0.000000e+00 : f32
    %15 = vector.broadcast %cst_8 : f32 to vector<32x32xf32>
    %16 = arith.cmpf ogt, %14, %15 : vector<32x32xf32>
    %cst_9 = arith.constant 2.000000e-01 : f32
    %17 = vector.broadcast %cst_9 : f32 to vector<32x32xf32>
    %18 = arith.mulf %17, %14 : vector<32x32xf32>
    %19 = arith.select %16, %14, %18 : vector<32x32xi1>, vector<32x32xf32>
    %20 = arith.addf %19, %1 : vector<32x32xf32>
    %cst_10 = arith.constant dense<0xFF800000> : vector<32xf32>
    %21 = vector.multi_reduction <maximumf>, %20, %cst_10 [1] : vector<32x32xf32> to vector<32xf32>
    %22 = vector.shape_cast %21 : vector<32xf32> to vector<32x1xf32>
    %23 = vector.broadcast %22 : vector<32x1xf32> to vector<32x32xf32>
    %24 = arith.subf %20, %23 : vector<32x32xf32>
    %25 = math.exp %24 : vector<32x32xf32>
    %cst_11 = arith.constant dense<0.000000e+00> : vector<32xf32>
    %26 = vector.multi_reduction <add>, %25, %cst_11 [1] : vector<32x32xf32> to vector<32xf32>
    %27 = vector.shape_cast %26 : vector<32xf32> to vector<32x1xf32>
    %28 = tpu.reciprocal %27 {approx = true} : vector<32x1xf32> -> vector<32x1xf32>
    %29 = vector.broadcast %28 : vector<32x1xf32> to vector<32x32xf32>
    %30 = arith.mulf %25, %29 : vector<32x32xf32>
    %31 = vector.extract_strided_slice %5 {offsets = [0, 0], sizes = [32, 32], strides = [1, 1]} : vector<32x64xf32> to vector<32x32xf32>
    %32 = arith.truncf %30 : vector<32x32xf32> to vector<32x32xbf16>
    %33 = arith.truncf %31 : vector<32x32xf32> to vector<32x32xbf16>
    %cst_12 = arith.constant dense<0.000000e+00> : vector<32x32xf32>
    %34 = tpu.matmul %32, %33, %cst_12 {dimension_numbers = #tpu.dot_dimension_numbers<[1], [0], [0], [1], [0, 0, 1, 1], [], []>} : vector<32x32xbf16>, vector<32x32xbf16>, vector<32x32xf32> -> vector<32x32xf32>
    %c0_13 = arith.constant 0 : index
    %c0_14 = arith.constant 0 : index
    %35 = vector.load %arg4[%c0_13, %c0_14] : memref<1x64xf32, #tpu.memory_space<vmem>>, vector<1x32xf32>
    %36 = vector.broadcast %35 : vector<1x32xf32> to vector<32x32xf32>
    %37 = arith.addf %34, %36 : vector<32x32xf32>
    %cst_15 = arith.constant 0.000000e+00 : f32
    %38 = vector.broadcast %cst_15 : f32 to vector<32x32xf32>
    %39 = arith.cmpf ogt, %37, %38 : vector<32x32xf32>
    %cst_16 = arith.constant 0.000000e+00 : f32
    %40 = vector.broadcast %cst_16 : f32 to vector<32x32xf32>
    %41 = arith.minimumf %37, %40 : vector<32x32xf32>
    %42 = math.exp %41 : vector<32x32xf32>
    %cst_17 = arith.constant 1.000000e+00 : f32
    %43 = vector.broadcast %cst_17 : f32 to vector<32x32xf32>
    %44 = arith.subf %42, %43 : vector<32x32xf32>
    %45 = arith.select %39, %37, %44 : vector<32x32xi1>, vector<32x32xf32>
    %c0_18 = arith.constant 0 : index
    %c0_19 = arith.constant 0 : index
    %46 = vector.load %arg9[%c0_18, %c0_19] : memref<32x128xf32, #tpu.memory_space<vmem>>, vector<32x32xf32>
    tpu.vector_store %arg9[%c0_18, %c0_19], %45 {strides = array<i32>} : memref<32x128xf32, #tpu.memory_space<vmem>>, vector<32x32xf32>,
    %47 = vector.extract_strided_slice %7 {offsets = [0, 1], sizes = [32, 1], strides = [1, 1]} : vector<32x4xf32> to vector<32x1xf32>
    %48 = vector.extract_strided_slice %9 {offsets = [1, 0], sizes = [1, 32], strides = [1, 1]} : vector<2x32xf32> to vector<1x32xf32>
    %49 = vector.broadcast %47 : vector<32x1xf32> to vector<32x32xf32>
    %50 = vector.broadcast %48 : vector<1x32xf32> to vector<32x32xf32>
    %51 = arith.addf %49, %50 : vector<32x32xf32>
    %cst_20 = arith.constant 0.000000e+00 : f32
    %52 = vector.broadcast %cst_20 : f32 to vector<32x32xf32>
    %53 = arith.cmpf ogt, %51, %52 : vector<32x32xf32>
    %cst_21 = arith.constant 2.000000e-01 : f32
    %54 = vector.broadcast %cst_21 : f32 to vector<32x32xf32>
    %55 = arith.mulf %54, %51 : vector<32x32xf32>
    %56 = arith.select %53, %51, %55 : vector<32x32xi1>, vector<32x32xf32>
    %57 = arith.addf %56, %1 : vector<32x32xf32>
    %cst_22 = arith.constant dense<0xFF800000> : vector<32xf32>
    %58 = vector.multi_reduction <maximumf>, %57, %cst_22 [1] : vector<32x32xf32> to vector<32xf32>
    %59 = vector.shape_cast %58 : vector<32xf32> to vector<32x1xf32>
    %60 = vector.broadcast %59 : vector<32x1xf32> to vector<32x32xf32>
    %61 = arith.subf %57, %60 : vector<32x32xf32>
    %62 = math.exp %61 : vector<32x32xf32>
    %cst_23 = arith.constant dense<0.000000e+00> : vector<32xf32>
    %63 = vector.multi_reduction <add>, %62, %cst_23 [1] : vector<32x32xf32> to vector<32xf32>
    %64 = vector.shape_cast %63 : vector<32xf32> to vector<32x1xf32>
    %65 = tpu.reciprocal %64 {approx = true} : vector<32x1xf32> -> vector<32x1xf32>
    %66 = vector.broadcast %65 : vector<32x1xf32> to vector<32x32xf32>
    %67 = arith.mulf %62, %66 : vector<32x32xf32>
    %68 = vector.extract_strided_slice %5 {offsets = [0, 32], sizes = [32, 32], strides = [1, 1]} : vector<32x64xf32> to vector<32x32xf32>
    %69 = arith.truncf %67 : vector<32x32xf32> to vector<32x32xbf16>
    %70 = arith.truncf %68 : vector<32x32xf32> to vector<32x32xbf16>
    %cst_24 = arith.constant dense<0.000000e+00> : vector<32x32xf32>
    %71 = tpu.matmul %69, %70, %cst_24 {dimension_numbers = #tpu.dot_dimension_numbers<[1], [0], [0], [1], [0, 0, 1, 1], [], []>} : vector<32x32xbf16>, vector<32x32xbf16>, vector<32x32xf32> -> vector<32x32xf32>
    %c0_25 = arith.constant 0 : index
    %c32 = arith.constant 32 : index
    %72 = vector.load %arg4[%c0_25, %c32] : memref<1x64xf32, #tpu.memory_space<vmem>>, vector<1x32xf32>
    %73 = vector.broadcast %72 : vector<1x32xf32> to vector<32x32xf32>
    %74 = arith.addf %71, %73 : vector<32x32xf32>
    %cst_26 = arith.constant 0.000000e+00 : f32
    %75 = vector.broadcast %cst_26 : f32 to vector<32x32xf32>
    %76 = arith.cmpf ogt, %74, %75 : vector<32x32xf32>
    %cst_27 = arith.constant 0.000000e+00 : f32
    %77 = vector.broadcast %cst_27 : f32 to vector<32x32xf32>
    %78 = arith.minimumf %74, %77 : vector<32x32xf32>
    %79 = math.exp %78 : vector<32x32xf32>
    %cst_28 = arith.constant 1.000000e+00 : f32
    %80 = vector.broadcast %cst_28 : f32 to vector<32x32xf32>
    %81 = arith.subf %79, %80 : vector<32x32xf32>
    %82 = arith.select %76, %74, %81 : vector<32x32xi1>, vector<32x32xf32>
    %c0_29 = arith.constant 0 : index
    %c32_30 = arith.constant 32 : index
    %83 = vector.load %arg9[%c0_29, %c32_30] : memref<32x128xf32, #tpu.memory_space<vmem>>, vector<32x32xf32>
    tpu.vector_store %arg9[%c0_29, %c32_30], %82 {strides = array<i32>} : memref<32x128xf32, #tpu.memory_space<vmem>>, vector<32x32xf32>,
    %c0_31 = arith.constant 0 : index
    %c0_32 = arith.constant 0 : index
    %84 = vector.load %arg9[%c0_31, %c0_32] : memref<32x128xf32, #tpu.memory_space<vmem>>, vector<32x64xf32>
    %85 = arith.truncf %84 : vector<32x64xf32> to vector<32x64xbf16>
    %c0_33 = arith.constant 0 : index
    %c0_34 = arith.constant 0 : index
    %86 = vector.load %arg5[%c0_33, %c0_34] : memref<64x128xbf16, #tpu.memory_space<vmem>>, vector<64x128xbf16>
    %cst_35 = arith.constant dense<0.000000e+00> : vector<32x128xf32>
    %87 = tpu.matmul %85, %86, %cst_35 {dimension_numbers = #tpu.dot_dimension_numbers<[1], [0], [0], [1], [0, 0, 1, 1], [], []>} : vector<32x64xbf16>, vector<64x128xbf16>, vector<32x128xf32> -> vector<32x128xf32>
    %c0_36 = arith.constant 0 : index
    %c0_37 = arith.constant 0 : index
    %88 = vector.load %arg6[%c0_36, %c0_37] : memref<128x2xf32, #tpu.memory_space<vmem>>, vector<128x2xf32>
    %cst_38 = arith.constant dense<0.000000e+00> : vector<32x2xf32>
    %89 = tpu.matmul %87, %88, %cst_38 {dimension_numbers = #tpu.dot_dimension_numbers<[1], [0], [0], [1], [0, 0, 1, 1], [], []>} : vector<32x128xf32>, vector<128x2xf32>, vector<32x2xf32> -> vector<32x2xf32>
    %90 = vector.extract_strided_slice %89 {offsets = [0, 1], sizes = [32, 1], strides = [1, 1]} : vector<32x2xf32> to vector<32x1xf32>
    %91 = tpu.transpose %90, [1, 0] : vector<32x1xf32> -> vector<1x32xf32>
    %92 = vector.extract_strided_slice %89 {offsets = [0, 0], sizes = [32, 1], strides = [1, 1]} : vector<32x2xf32> to vector<32x1xf32>
    %93 = vector.broadcast %92 : vector<32x1xf32> to vector<32x32xf32>
    %94 = vector.broadcast %91 : vector<1x32xf32> to vector<32x32xf32>
    %95 = arith.addf %93, %94 : vector<32x32xf32>
    %cst_39 = arith.constant 0.000000e+00 : f32
    %96 = vector.broadcast %cst_39 : f32 to vector<32x32xf32>
    %97 = arith.cmpf ogt, %95, %96 : vector<32x32xf32>
    %cst_40 = arith.constant 2.000000e-01 : f32
    %98 = vector.broadcast %cst_40 : f32 to vector<32x32xf32>
    %99 = arith.mulf %98, %95 : vector<32x32xf32>
    %100 = arith.select %97, %95, %99 : vector<32x32xi1>, vector<32x32xf32>
    %101 = arith.addf %100, %1 : vector<32x32xf32>
    %cst_41 = arith.constant dense<0xFF800000> : vector<32xf32>
    %102 = vector.multi_reduction <maximumf>, %101, %cst_41 [1] : vector<32x32xf32> to vector<32xf32>
    %103 = vector.shape_cast %102 : vector<32xf32> to vector<32x1xf32>
    %104 = vector.broadcast %103 : vector<32x1xf32> to vector<32x32xf32>
    %105 = arith.subf %101, %104 : vector<32x32xf32>
    %106 = math.exp %105 : vector<32x32xf32>
    %cst_42 = arith.constant dense<0.000000e+00> : vector<32xf32>
    %107 = vector.multi_reduction <add>, %106, %cst_42 [1] : vector<32x32xf32> to vector<32xf32>
    %108 = vector.shape_cast %107 : vector<32xf32> to vector<32x1xf32>
    %109 = tpu.reciprocal %108 {approx = true} : vector<32x1xf32> -> vector<32x1xf32>
    %110 = vector.broadcast %109 : vector<32x1xf32> to vector<32x32xf32>
    %111 = arith.mulf %106, %110 : vector<32x32xf32>
    %112 = arith.truncf %111 : vector<32x32xf32> to vector<32x32xbf16>
    %113 = arith.truncf %87 : vector<32x128xf32> to vector<32x128xbf16>
    %cst_43 = arith.constant dense<0.000000e+00> : vector<32x128xf32>
    %114 = tpu.matmul %112, %113, %cst_43 {dimension_numbers = #tpu.dot_dimension_numbers<[1], [0], [0], [1], [0, 0, 1, 1], [], []>} : vector<32x32xbf16>, vector<32x128xbf16>, vector<32x128xf32> -> vector<32x128xf32>
    %cst_44 = arith.constant 1.000000e+00 : f32
    %115 = vector.broadcast %cst_44 : f32 to vector<32x128xf32>
    %116 = arith.mulf %114, %115 : vector<32x128xf32>
    %c0_45 = arith.constant 0 : index
    %c0_46 = arith.constant 0 : index
    %117 = vector.load %arg7[%c0_45, %c0_46] : memref<1x128xf32, #tpu.memory_space<vmem>>, vector<1x128xf32>
    %118 = vector.broadcast %117 : vector<1x128xf32> to vector<32x128xf32>
    %119 = arith.addf %116, %118 : vector<32x128xf32>
    %c0_47 = arith.constant 0 : index
    %c0_48 = arith.constant 0 : index
    %120 = vector.load %arg8[%c0_47, %c0_48] : memref<32x128xf32, #tpu.memory_space<vmem>>, vector<32x128xf32>
    tpu.vector_store %arg8[%c0_47, %c0_48], %119 {strides = array<i32>} : memref<32x128xf32, #tpu.memory_space<vmem>>, vector<32x128xf32>,
    return
  }
}

</mosaic_0001>

<llo_original>
// kernel: tpu_custom_call.1
$region0: #{tpu_custom_call.1}
  #allocation0 [shape = 'u32[]', space=smem, size = 0x4, offset = 0x4, fixed_abs, tag = 'smem constant byte address 0x4 - core index']
  #allocation1 [shape = 'u32[72,128]{1,0:T(1,128)}', space=vmem, size = 0x9000, scoped, tag = 'internal scratch']
  #allocation2 [shape = 'f32[32,128]{1,0:T(8,128)}', space=vmem, size = 0x4000, scoped, tag = 'scratch operand']
  %s0 = inlined_call_operand.vmem [shape: f32[32,16], index: 0, kind: input, shape index: {}]
  %s1 = inlined_call_operand.vmem [shape: bf16[32,32], index: 1, kind: input, shape index: {}]
  %s2 = inlined_call_operand.vmem [shape: bf16[16,64], index: 2, kind: input, shape index: {}]
  %s3 = inlined_call_operand.vmem [shape: f32[64,4], index: 3, kind: input, shape index: {}]
  %s4 = inlined_call_operand.vmem [shape: f32[1,64], index: 4, kind: input, shape index: {}]
  %s5 = inlined_call_operand.vmem [shape: bf16[64,128], index: 5, kind: input, shape index: {}]
  %s6 = inlined_call_operand.vmem [shape: f32[128,2], index: 6, kind: input, shape index: {}]
  %s7 = inlined_call_operand.vmem [shape: f32[1,128], index: 7, kind: input, shape index: {}]
  %s8 = inlined_call_operand.hbm [shape: f32[32,128], index: 8, kind: output, shape index: {}]
  %s9 = sld [smem:[#allocation0]]
  $region42: #{tpu_custom_call.1} parent=0
    _
  %s11 = ssub.s32 1, %s9
  %s12 = scalar_select 0, %s11, %s9
  $region1: #{tpu_custom_call.1} parent=0
    #allocation3 [shape = 'u8[16384]{0}', space=vmem, size = 0x4000, scoped, tag = 'output window, operand 0, single buffered']
    #allocation4 [shape = 's32[1]{0}', space=sflag, size = 0x4, scoped, tag = 'scoped memory for tpu_custom_call.1']
    %13 = vsyncpa [#allocation4], 0
    // Predicated region
    $region2: #{tpu_custom_call.1} parent=1 // pred_check
      _
    $region3: #{tpu_custom_call.1} parent=1 // pred_check_branch
      %15 = sbr.rel (0) target = $region5
    $region4: #{tpu_custom_call.1} parent=1 // pred_region
      _
    $region5: #{tpu_custom_call.1} parent=1 // pred_fallthru
      _
    // Predicated region
    $region6: #{tpu_custom_call.1} parent=1 // pred_check
      _
    $region7: #{tpu_custom_call.1} parent=1 // pred_check_branch
      %17 = sbr.rel (0) target = $region9
    $region8: #{tpu_custom_call.1} parent=1 // pred_region
      _
    $region9: #{tpu_custom_call.1} parent=1 // pred_fallthru
      _
    // Predicated region
    $region10: #{tpu_custom_call.1} parent=1 // pred_check
      _
    $region11: #{tpu_custom_call.1} parent=1 // pred_check_branch
      %19 = sbr.rel (0) target = $region13
    $region12: #{tpu_custom_call.1} parent=1 // pred_region
      _
    $region13: #{tpu_custom_call.1} parent=1 // pred_fallthru
      _
    // Predicated region
    $region14: #{tpu_custom_call.1} parent=1 // pred_check
      _
    $region15: #{tpu_custom_call.1} parent=1 // pred_check_branch
      %21 = sbr.rel (0) target = $region17
    $region16: #{tpu_custom_call.1} parent=1 // pred_region
      _
    $region17: #{tpu_custom_call.1} parent=1 // pred_fallthru
      _
    // Predicated region
    $region18: #{tpu_custom_call.1} parent=1 // pred_check
      _
    $region19: #{tpu_custom_call.1} parent=1 // pred_check_branch
      %23 = sbr.rel (0) target = $region21
    $region20: #{tpu_custom_call.1} parent=1 // pred_region
      _
    $region21: #{tpu_custom_call.1} parent=1 // pred_fallthru
      _
    // Predicated region
    $region22: #{tpu_custom_call.1} parent=1 // pred_check
      _
    $region23: #{tpu_custom_call.1} parent=1 // pred_check_branch
      %25 = sbr.rel (0) target = $region25
    $region24: #{tpu_custom_call.1} parent=1 // pred_region
      _
    $region25: #{tpu_custom_call.1} parent=1 // pred_fallthru
      _
    // Predicated region
    $region26: #{tpu_custom_call.1} parent=1 // pred_check
      _
    $region27: #{tpu_custom_call.1} parent=1 // pred_check_branch
      %27 = sbr.rel (0) target = $region29
    $region28: #{tpu_custom_call.1} parent=1 // pred_region
      _
    $region29: #{tpu_custom_call.1} parent=1 // pred_fallthru
      _
    // Predicated region
    $region30: #{tpu_custom_call.1} parent=1 // pred_check
      _
    $region31: #{tpu_custom_call.1} parent=1 // pred_check_branch
      %29 = sbr.rel (0) target = $region33
    $region32: #{tpu_custom_call.1} parent=1 // pred_region
      _
    $region33: #{tpu_custom_call.1} parent=1 // pred_fallthru
      _
    %v31 = vld [vmem:[%s1] sm:$0xf]
    %v32 = vld [vmem:[%s1 + $0x4] sm:$0xf]
    %v33 = vld [vmem:[%s1 + $0x8] sm:$0xf]
    %v34 = vld [vmem:[%s1 + $0xc] sm:$0xf]
    %v35 = vunpack.c.l.bf16 %v31
    %v36 = vunpack.c.l.bf16 %v32
    %v37 = vunpack.c.l.bf16 %v33
    %v38 = vunpack.c.l.bf16 %v34
    %v39 = vld [vmem:[%s0] sm:$0xff]
    %v40 = vld [vmem:[%s0 + $0x8] sm:$0xff]
    %v41 = vld [vmem:[%s0 + $0x10] sm:$0xff]
    %v42 = vld [vmem:[%s0 + $0x18] sm:$0xff]
    %v43 = vpack.c.bf16 %v40, %v39
    %v44 = vpack.c.bf16 %v42, %v41
    %v45 = vld [vmem:[%s2] sm:$0xf]
    %v46 = vld [vmem:[%s2 + $0x4] sm:$0xf]
    %v49 = vunpack.c.l.b16 %v45
    %v50 = vunpack.c.l.b16 %v46
    %v51 = vpack.c.b16 %v50, %v49
    %vm53 = vcmask 130048
    %v55 = vsel %vm53, %v43, 0
    %v58 = vsel %vm53, %v44, 0
    %60 = vmatpush.bf16.msra.mxu0 0
    %61 = vmatpush.bf16.msra.mxu0 0
    %62 = vmatpush.bf16.msra.mxu0 0
    %63 = vmatpush.bf16.msra.mxu0 0
    %64 = vmatpush.bf16.msra.mxu0 0
    %65 = vmatpush.bf16.msra.mxu0 0
    %66 = vmatpush.bf16.msra.mxu0 0
    %67 = vmatpush.bf16.msra.mxu0 %v51
    %68 = vmatmul.bf16.gmra.mxu0 %v55
    %v69 = vpop.f32.mrf.mxu0
    %v70 = vadd.f32 0.0, %v69
    %v71 = vpop.f32.mrf.mxu0
    %v72 = vadd.f32 0.0, %v71
    %73 = vmatmul.bf16.gmra.mxu0 %v58
    %v74 = vpop.f32.mrf.mxu0
    %v75 = vadd.f32 0.0, %v74
    %v76 = vpop.f32.mrf.mxu0
    %v77 = vadd.f32 0.0, %v76
    %78 = vdwg.mxu0
    %v79 = vld [vmem:[%s3] sm:$0xff]
    %v80 = vld [vmem:[%s3 + $0x8] sm:$0xff]
    %v81 = vld [vmem:[%s3 + $0x10] sm:$0xff]
    %v82 = vld [vmem:[%s3 + $0x18] sm:$0xff]
    %v83 = vld [vmem:[%s3 + $0x20] sm:$0xff]
    %v84 = vld [vmem:[%s3 + $0x28] sm:$0xff]
    %v85 = vld [vmem:[%s3 + $0x30] sm:$0xff]
    %v86 = vld [vmem:[%s3 + $0x38] sm:$0xff]
    %vm87 = vcmask 523264
    %v89 = vsel %vm87, %v70, 0
    %v92 = vsel %vm87, %v72, 0
    %v95 = vsel %vm87, %v75, 0
    %v98 = vsel %vm87, %v77, 0
    %100 = vmatpush.msra.mxu0 0.0
    %101 = vmatpush.msra.mxu0 0.0
    %102 = vmatpush.msra.mxu0 0.0
    %103 = vmatpush.msra.mxu0 0.0
    %104 = vmatpush.msra.mxu0 0.0
    %105 = vmatpush.msra.mxu0 0.0
    %106 = vmatpush.msra.mxu0 0.0
    %107 = vmatpush.msra.mxu0 0.0
    %108 = vmatpush.msra.mxu0 %v86
    %109 = vmatpush.msra.mxu0 %v85
    %110 = vmatpush.msra.mxu0 %v84
    %111 = vmatpush.msra.mxu0 %v83
    %112 = vmatpush.msra.mxu0 %v82
    %113 = vmatpush.msra.mxu0 %v81
    %114 = vmatpush.msra.mxu0 %v80
    %115 = vmatpush.msra.mxu0 %v79
    %116 = vmatmul.f32.gmra.mxu0 %v89
    %v117 = vpop.f32.mrf.mxu0
    %v118 = vadd.f32 0.0, %v117
    %119 = vmatmul.f32.gmra.mxu0 %v92
    %v120 = vpop.f32.mrf.mxu0
    %v121 = vadd.f32 0.0, %v120
    %122 = vmatmul.f32.gmra.mxu0 %v95
    %v123 = vpop.f32.mrf.mxu0
    %v124 = vadd.f32 0.0, %v123
    %125 = vmatmul.f32.gmra.mxu0 %v98
    %v126 = vpop.f32.mrf.mxu0
    %v127 = vadd.f32 0.0, %v126
    %128 = vdwg.mxu0
    %133 = vrot.lane.b32.xlu0 %v118, 126
    %v134 = vpop.permute.xlu0 %133
    %135 = vrot.lane.b32.xlu0 %v121, 126
    %v136 = vpop.permute.xlu0 %135
    %137 = vrot.lane.b32.xlu0 %v124, 126
    %v138 = vpop.permute.xlu0 %137
    %139 = vrot.lane.b32.xlu0 %v127, 126
    %v140 = vpop.permute.xlu0 %139
    %145 = vxpose.xlu0.b32.start [1/16] %v134, 128
    %146 = vxpose.xlu0.b32.cont [2/16] %v136, 128
    %147 = vxpose.xlu0.b32.cont [3/16] %v138, 128
    %148 = vxpose.xlu0.b32.cont [4/16] %v140, 128
    %149 = vxpose.xlu0.b32.cont [5/16] 0.0, 128
    %150 = vxpose.xlu0.b32.cont [6/16] 0.0, 128
    %151 = vxpose.xlu0.b32.cont [7/16] 0.0, 128
    %152 = vxpose.xlu0.b32.cont [8/16] 0.0, 128
    %153 = vxpose.xlu0.b32.cont [9/16] 0.0, 128
    %154 = vxpose.xlu0.b32.cont [10/16] 0.0, 128
    %155 = vxpose.xlu0.b32.cont [11/16] 0.0, 128
    %156 = vxpose.xlu0.b32.cont [12/16] 0.0, 128
    %157 = vxpose.xlu0.b32.cont [13/16] 0.0, 128
    %158 = vxpose.xlu0.b32.cont [14/16] 0.0, 128
    %159 = vxpose.xlu0.b32.cont [15/16] 0.0, 128
    %160 = vxpose.xlu0.b32.end [16/16] 0.0, 128
    %v161 = vpop.trf.xlu0
    %v162 = vpop.trf.xlu0
    %v163 = vpop.trf.xlu0
    %v164 = vpop.trf.xlu0
    %v165 = vpop.trf.xlu0
    %v166 = vpop.trf.xlu0
    %v167 = vpop.trf.xlu0
    %v168 = vpop.trf.xlu0
    %v169 = vpop.trf.xlu0
    %v170 = vpop.trf.xlu0
    %v171 = vpop.trf.xlu0
    %v172 = vpop.trf.xlu0
    %v173 = vpop.trf.xlu0
    %v174 = vpop.trf.xlu0
    %v175 = vpop.trf.xlu0
    %v176 = vpop.trf.xlu0
    %177 = vset.pattern.permute.xlu0 0
    %178 = vperm.xlu0 %177, %v118
    %v179 = vpop.permute.xlu0 %178
    %181 = vset.pattern.permute.xlu0 0
    %182 = vperm.xlu0 %181, %v121
    %v183 = vpop.permute.xlu0 %182
    %185 = vset.pattern.permute.xlu0 0
    %186 = vperm.xlu0 %185, %v124
    %v187 = vpop.permute.xlu0 %186
    %189 = vset.pattern.permute.xlu0 0
    %190 = vperm.xlu0 %189, %v127
    %v191 = vpop.permute.xlu0 %190
    %v193 = vperm.slane %v161, 0
    %v194 = vadd.f32 %v179, %v193
    %v195 = vadd.f32 %v183, %v193
    %v196 = vadd.f32 %v187, %v193
    %v197 = vadd.f32 %v191, %v193
    %vm198 = vcmp.gt.f32.partialorder %v194, 0.0
    %vm199 = vcmp.gt.f32.partialorder %v195, 0.0
    %vm200 = vcmp.gt.f32.partialorder %v196, 0.0
    %vm201 = vcmp.gt.f32.partialorder %v197, 0.0
    %v202 = vmul.f32 %v194, 0.2
    %v203 = vmul.f32 %v195, 0.2
    %v204 = vmul.f32 %v196, 0.2
    %v205 = vmul.f32 %v197, 0.2
    %v206 = vsel %vm198, %v194, %v202
    %v207 = vsel %vm199, %v195, %v203
    %v208 = vsel %vm200, %v196, %v204
    %v209 = vsel %vm201, %v197, %v205
    %v210 = vadd.f32 %v206, %v35
    %v211 = vadd.f32 %v207, %v36
    %v212 = vadd.f32 %v208, %v37
    %v213 = vadd.f32 %v209, %v38
    %vm214 = vcmask 261120
    %v215 = vsel %vm214, %v210, -inf
    %216 = vmax.xlane.f32.xlu0 %v215
    %v217 = vpop.xlane.xlu0 %216
    %v218 = vsel %vm214, %v211, -inf
    %219 = vmax.xlane.f32.xlu0 %v218
    %v220 = vpop.xlane.xlu0 %219
    %v221 = vsel %vm214, %v212, -inf
    %222 = vmax.xlane.f32.xlu0 %v221
    %v223 = vpop.xlane.xlu0 %222
    %v224 = vsel %vm214, %v213, -inf
    %225 = vmax.xlane.f32.xlu0 %v224
    %v226 = vpop.xlane.xlu0 %225
    %v227 = vsub.f32 %v210, %v217
    %v228 = vsub.f32 %v211, %v220
    %v229 = vsub.f32 %v212, %v223
    %v230 = vsub.f32 %v213, %v226
    %v231 = vmul.f32 %v227, 1.442695
    %v232 = vpow.pop %v231
    %v233 = vmul.f32 %v228, 1.442695
    %v234 = vpow.pop %v233
    %v235 = vmul.f32 %v229, 1.442695
    %v236 = vpow.pop %v235
    %v237 = vmul.f32 %v230, 1.442695
    %v238 = vpow.pop %v237
    %v239 = vsel %vm214, %v232, 0.0
    %240 = vadd.xlane.f32.xlu0 %v239
    %v241 = vpop.xlane.xlu0 %240
    %v242 = vsel %vm214, %v234, 0.0
    %243 = vadd.xlane.f32.xlu0 %v242
    %v244 = vpop.xlane.xlu0 %243
    %v245 = vsel %vm214, %v236, 0.0
    %246 = vadd.xlane.f32.xlu0 %v245
    %v247 = vpop.xlane.xlu0 %246
    %v248 = vsel %vm214, %v238, 0.0
    %249 = vadd.xlane.f32.xlu0 %v248
    %v250 = vpop.xlane.xlu0 %249
    %v251 = vrcp.pop %v241
    %v252 = vrcp.pop %v244
    %v253 = vrcp.pop %v247
    %v254 = vrcp.pop %v250
    %v255 = vmul.f32 %v232, %v251
    %v256 = vmul.f32 %v234, %v252
    %v257 = vmul.f32 %v236, %v253
    %v258 = vmul.f32 %v238, %v254
    %v259 = vpack.c.bf16 %v256, %v255
    %v260 = vpack.c.bf16 %v258, %v257
    %v261 = vpack.c.bf16 %v72, %v70
    %v262 = vpack.c.bf16 %v77, %v75
    %v263 = vld [vmem:[%s4] sm:$0x1]
    %v265 = vperm.slane %v263, 0
    %v268 = vsel %vm214, %v259, 0
    %v271 = vsel %vm214, %v260, 0
    %273 = vmatpush.bf16.msra.mxu0 0
    %274 = vmatpush.bf16.msra.mxu0 0
    %275 = vmatpush.bf16.msra.mxu0 0
    %276 = vmatpush.bf16.msra.mxu0 0
    %277 = vmatpush.bf16.msra.mxu0 0
    %278 = vmatpush.bf16.msra.mxu0 0
    %279 = vmatpush.bf16.msra.mxu0 %v262
    %280 = vmatpush.bf16.msra.mxu0 %v261
    %281 = vmatmul.bf16.gmra.mxu0 %v268
    %v282 = vpop.f32.mrf.mxu0
    %v283 = vadd.f32 %v265, %v282
    %v284 = vpop.f32.mrf.mxu0
    %v285 = vadd.f32 %v265, %v284
    %286 = vmatmul.bf16.gmra.mxu0 %v271
    %v287 = vpop.f32.mrf.mxu0
    %v288 = vadd.f32 %v265, %v287
    %v289 = vpop.f32.mrf.mxu0
    %v290 = vadd.f32 %v265, %v289
    %291 = vdwg.mxu0
    %vm292 = vcmp.gt.f32.partialorder %v283, 0.0
    %vm293 = vcmp.gt.f32.partialorder %v285, 0.0
    %vm294 = vcmp.gt.f32.partialorder %v288, 0.0
    %vm295 = vcmp.gt.f32.partialorder %v290, 0.0
    %v296 = vmin.f32 %v283, 0.0
    %v297 = vmin.f32 %v285, 0.0
    %v298 = vmin.f32 %v288, 0.0
    %v299 = vmin.f32 %v290, 0.0
    %v300 = vmul.f32 %v296, 1.442695
    %v301 = vpow.pop %v300
    %v302 = vmul.f32 %v297, 1.442695
    %v303 = vpow.pop %v302
    %v304 = vmul.f32 %v298, 1.442695
    %v305 = vpow.pop %v304
    %v306 = vmul.f32 %v299, 1.442695
    %v307 = vpow.pop %v306
    %v308 = vsub.f32 %v301, 1.0
    %v309 = vsub.f32 %v303, 1.0
    %v310 = vsub.f32 %v305, 1.0
    %v311 = vsub.f32 %v307, 1.0
    %v312 = vsel %vm292, %v283, %v308
    %v313 = vsel %vm293, %v285, %v309
    %v314 = vsel %vm294, %v288, %v310
    %v315 = vsel %vm295, %v290, %v311
    %316 = vst.msk [vmem:[#allocation2] sm:$0xff] %vm214, %v312
    %317 = vst.msk [vmem:[#allocation2 + $0x8] sm:$0xff] %vm214, %v313
    %318 = vst.msk [vmem:[#allocation2 + $0x10] sm:$0xff] %vm214, %v314
    %319 = vst.msk [vmem:[#allocation2 + $0x18] sm:$0xff] %vm214, %v315
    %320 = vset.pattern.permute.xlu0 1
    %321 = vperm.xlu0 %320, %v118
    %v322 = vpop.permute.xlu0 %321
    %324 = vset.pattern.permute.xlu0 1
    %325 = vperm.xlu0 %324, %v121
    %v326 = vpop.permute.xlu0 %325
    %328 = vset.pattern.permute.xlu0 1
    %329 = vperm.xlu0 %328, %v124
    %v330 = vpop.permute.xlu0 %329
    %332 = vset.pattern.permute.xlu0 1
    %333 = vperm.xlu0 %332, %v127
    %v334 = vpop.permute.xlu0 %333
    %v336 = vperm.slane %v161, 1
    %v337 = vadd.f32 %v322, %v336
    %v338 = vadd.f32 %v326, %v336
    %v339 = vadd.f32 %v330, %v336
    %v340 = vadd.f32 %v334, %v336
    %vm341 = vcmp.gt.f32.partialorder %v337, 0.0
    %vm342 = vcmp.gt.f32.partialorder %v338, 0.0
    %vm343 = vcmp.gt.f32.partialorder %v339, 0.0
    %vm344 = vcmp.gt.f32.partialorder %v340, 0.0
    %v345 = vmul.f32 %v337, 0.2
    %v346 = vmul.f32 %v338, 0.2
    %v347 = vmul.f32 %v339, 0.2
    %v348 = vmul.f32 %v340, 0.2
    %v349 = vsel %vm341, %v337, %v345
    %v350 = vsel %vm342, %v338, %v346
    %v351 = vsel %vm343, %v339, %v347
    %v352 = vsel %vm344, %v340, %v348
    %v353 = vadd.f32 %v349, %v35
    %v354 = vadd.f32 %v350, %v36
    %v355 = vadd.f32 %v351, %v37
    %v356 = vadd.f32 %v352, %v38
    %v357 = vsel %vm214, %v353, -inf
    %358 = vmax.xlane.f32.xlu0 %v357
    %v359 = vpop.xlane.xlu0 %358
    %v360 = vsel %vm214, %v354, -inf
    %361 = vmax.xlane.f32.xlu0 %v360
    %v362 = vpop.xlane.xlu0 %361
    %v363 = vsel %vm214, %v355, -inf
    %364 = vmax.xlane.f32.xlu0 %v363
    %v365 = vpop.xlane.xlu0 %364
    %v366 = vsel %vm214, %v356, -inf
    %367 = vmax.xlane.f32.xlu0 %v366
    %v368 = vpop.xlane.xlu0 %367
    %v369 = vsub.f32 %v353, %v359
    %v370 = vsub.f32 %v354, %v362
    %v371 = vsub.f32 %v355, %v365
    %v372 = vsub.f32 %v356, %v368
    %v373 = vmul.f32 %v369, 1.442695
    %v374 = vpow.pop %v373
    %v375 = vmul.f32 %v370, 1.442695
    %v376 = vpow.pop %v375
    %v377 = vmul.f32 %v371, 1.442695
    %v378 = vpow.pop %v377
    %v379 = vmul.f32 %v372, 1.442695
    %v380 = vpow.pop %v379
    %v381 = vsel %vm214, %v374, 0.0
    %382 = vadd.xlane.f32.xlu0 %v381
    %v383 = vpop.xlane.xlu0 %382
    %v384 = vsel %vm214, %v376, 0.0
    %385 = vadd.xlane.f32.xlu0 %v384
    %v386 = vpop.xlane.xlu0 %385
    %v387 = vsel %vm214, %v378, 0.0
    %388 = vadd.xlane.f32.xlu0 %v387
    %v389 = vpop.xlane.xlu0 %388
    %v390 = vsel %vm214, %v380, 0.0
    %391 = vadd.xlane.f32.xlu0 %v390
    %v392 = vpop.xlane.xlu0 %391
    %v393 = vrcp.pop %v383
    %v394 = vrcp.pop %v386
    %v395 = vrcp.pop %v389
    %v396 = vrcp.pop %v392
    %v397 = vmul.f32 %v374, %v393
    %v398 = vmul.f32 %v376, %v394
    %v399 = vmul.f32 %v378, %v395
    %v400 = vmul.f32 %v380, %v396
    %v401 = vpack.c.bf16 %v398, %v397
    %v402 = vpack.c.bf16 %v400, %v399
    %v403 = vld [vmem:[%s4] sm:$0x1]
    %v405 = vperm.slane %v403, 0
    %408 = vrot.lane.b32.xlu0 %v261, 96
    %v409 = vpop.permute.xlu0 %408
    %410 = vrot.lane.b32.xlu0 %v262, 96
    %v411 = vpop.permute.xlu0 %410
    %414 = vrot.lane.b32.xlu0 %v405, 96
    %v415 = vpop.permute.xlu0 %414
    %v418 = vsel %vm214, %v401, 0
    %v421 = vsel %vm214, %v402, 0
    %423 = vmatpush.bf16.msra.mxu0 0
    %424 = vmatpush.bf16.msra.mxu0 0
    %425 = vmatpush.bf16.msra.mxu0 0
    %426 = vmatpush.bf16.msra.mxu0 0
    %427 = vmatpush.bf16.msra.mxu0 0
    %428 = vmatpush.bf16.msra.mxu0 0
    %429 = vmatpush.bf16.msra.mxu0 %v411
    %430 = vmatpush.bf16.msra.mxu0 %v409
    %431 = vmatmul.bf16.gmra.mxu0 %v418
    %v432 = vpop.f32.mrf.mxu0
    %v433 = vadd.f32 %v415, %v432
    %v434 = vpop.f32.mrf.mxu0
    %v435 = vadd.f32 %v415, %v434
    %436 = vmatmul.bf16.gmra.mxu0 %v421
    %v437 = vpop.f32.mrf.mxu0
    %v438 = vadd.f32 %v415, %v437
    %v439 = vpop.f32.mrf.mxu0
    %v440 = vadd.f32 %v415, %v439
    %441 = vdwg.mxu0
    %vm442 = vcmp.gt.f32.partialorder %v433, 0.0
    %vm443 = vcmp.gt.f32.partialorder %v435, 0.0
    %vm444 = vcmp.gt.f32.partialorder %v438, 0.0
    %vm445 = vcmp.gt.f32.partialorder %v440, 0.0
    %v446 = vmin.f32 %v433, 0.0
    %v447 = vmin.f32 %v435, 0.0
    %v448 = vmin.f32 %v438, 0.0
    %v449 = vmin.f32 %v440, 0.0
    %v450 = vmul.f32 %v446, 1.442695
    %v451 = vpow.pop %v450
    %v452 = vmul.f32 %v447, 1.442695
    %v453 = vpow.pop %v452
    %v454 = vmul.f32 %v448, 1.442695
    %v455 = vpow.pop %v454
    %v456 = vmul.f32 %v449, 1.442695
    %v457 = vpow.pop %v456
    %v458 = vsub.f32 %v451, 1.0
    %v459 = vsub.f32 %v453, 1.0
    %v460 = vsub.f32 %v455, 1.0
    %v461 = vsub.f32 %v457, 1.0
    %v462 = vsel %vm442, %v433, %v458
    %v463 = vsel %vm443, %v435, %v459
    %v464 = vsel %vm444, %v438, %v460
    %v465 = vsel %vm445, %v440, %v461
    %470 = vrot.lane.b32.xlu0 %v462, 32
    %v471 = vpop.permute.xlu0 %470
    %472 = vrot.lane.b32.xlu0 %v463, 32
    %v473 = vpop.permute.xlu0 %472
    %474 = vrot.lane.b32.xlu0 %v464, 32
    %v475 = vpop.permute.xlu0 %474
    %476 = vrot.lane.b32.xlu0 %v465, 32
    %v477 = vpop.permute.xlu0 %476
    %vm482 = vcmask 523520
    %483 = vst.msk [vmem:[#allocation2] sm:$0xff] %vm482, %v471
    %484 = vst.msk [vmem:[#allocation2 + $0x8] sm:$0xff] %vm482, %v473
    %485 = vst.msk [vmem:[#allocation2 + $0x10] sm:$0xff] %vm482, %v475
    %486 = vst.msk [vmem:[#allocation2 + $0x18] sm:$0xff] %vm482, %v477
    %v487 = vld [vmem:[#allocation2] sm:$0xff]
    %v488 = vld [vmem:[#allocation2 + $0x8] sm:$0xff]
    %v489 = vld [vmem:[#allocation2 + $0x10] sm:$0xff]
    %v490 = vld [vmem:[#allocation2 + $0x18] sm:$0xff]
    %v491 = vpack.c.bf16 %v488, %v487
    %v492 = vpack.c.bf16 %v490, %v489
    %v493 = vld [vmem:[%s5] sm:$0xf]
    %v494 = vld [vmem:[%s5 + $0x4] sm:$0xf]
    %v495 = vld [vmem:[%s5 + $0x8] sm:$0xf]
    %v496 = vld [vmem:[%s5 + $0xc] sm:$0xf]
    %v497 = vld [vmem:[%s5 + $0x10] sm:$0xf]
    %v498 = vld [vmem:[%s5 + $0x14] sm:$0xf]
    %v499 = vld [vmem:[%s5 + $0x18] sm:$0xf]
    %v500 = vld [vmem:[%s5 + $0x1c] sm:$0xf]
    %v509 = vunpack.c.l.b16 %v493
    %v510 = vunpack.c.l.b16 %v494
    %v511 = vunpack.c.l.b16 %v495
    %v512 = vunpack.c.l.b16 %v496
    %v513 = vunpack.c.l.b16 %v497
    %v514 = vunpack.c.l.b16 %v498
    %v515 = vunpack.c.l.b16 %v499
    %v516 = vunpack.c.l.b16 %v500
    %v517 = vpack.c.b16 %v510, %v509
    %v518 = vpack.c.b16 %v512, %v511
    %v519 = vpack.c.b16 %v514, %v513
    %v520 = vpack.c.b16 %v516, %v515
    %v526 = vsel %vm87, %v491, 0
    %v529 = vsel %vm87, %v492, 0
    %531 = vmatpush.bf16.msra.mxu0 0
    %532 = vmatpush.bf16.msra.mxu0 0
    %533 = vmatpush.bf16.msra.mxu0 0
    %534 = vmatpush.bf16.msra.mxu0 0
    %535 = vmatpush.bf16.msra.mxu0 %v520
    %536 = vmatpush.bf16.msra.mxu0 %v519
    %537 = vmatpush.bf16.msra.mxu0 %v518
    %538 = vmatpush.bf16.msra.mxu0 %v517
    %539 = vmatmul.bf16.gmra.mxu0 %v526
    %v540 = vpop.f32.mrf.mxu0
    %v541 = vadd.f32 0.0, %v540
    %v542 = vpop.f32.mrf.mxu0
    %v543 = vadd.f32 0.0, %v542
    %544 = vmatmul.bf16.gmra.mxu0 %v529
    %v545 = vpop.f32.mrf.mxu0
    %v546 = vadd.f32 0.0, %v545
    %v547 = vpop.f32.mrf.mxu0
    %v548 = vadd.f32 0.0, %v547
    %549 = vdwg.mxu0
    %v550 = vld [vmem:[%s6] sm:$0xff]
    %v551 = vld [vmem:[%s6 + $0x8] sm:$0xff]
    %v552 = vld [vmem:[%s6 + $0x10] sm:$0xff]
    %v553 = vld [vmem:[%s6 + $0x18] sm:$0xff]
    %v554 = vld [vmem:[%s6 + $0x20] sm:$0xff]
    %v555 = vld [vmem:[%s6 + $0x28] sm:$0xff]
    %v556 = vld [vmem:[%s6 + $0x30] sm:$0xff]
    %v557 = vld [vmem:[%s6 + $0x38] sm:$0xff]
    %v558 = vld [vmem:[%s6 + $0x40] sm:$0xff]
    %v559 = vld [vmem:[%s6 + $0x48] sm:$0xff]
    %v560 = vld [vmem:[%s6 + $0x50] sm:$0xff]
    %v561 = vld [vmem:[%s6 + $0x58] sm:$0xff]
    %v562 = vld [vmem:[%s6 + $0x60] sm:$0xff]
    %v563 = vld [vmem:[%s6 + $0x68] sm:$0xff]
    %v564 = vld [vmem:[%s6 + $0x70] sm:$0xff]
    %v565 = vld [vmem:[%s6 + $0x78] sm:$0xff]
    %566 = vmatpush.msra.mxu0 %v565
    %567 = vmatpush.msra.mxu0 %v564
    %568 = vmatpush.msra.mxu0 %v563
    %569 = vmatpush.msra.mxu0 %v562
    %570 = vmatpush.msra.mxu0 %v561
    %571 = vmatpush.msra.mxu0 %v560
    %572 = vmatpush.msra.mxu0 %v559
    %573 = vmatpush.msra.mxu0 %v558
    %574 = vmatpush.msra.mxu0 %v557
    %575 = vmatpush.msra.mxu0 %v556
    %576 = vmatpush.msra.mxu0 %v555
    %577 = vmatpush.msra.mxu0 %v554
    %578 = vmatpush.msra.mxu0 %v553
    %579 = vmatpush.msra.mxu0 %v552
    %580 = vmatpush.msra.mxu0 %v551
    %581 = vmatpush.msra.mxu0 %v550
    %582 = vmatmul.f32.gmra.mxu0 %v541
    %v583 = vpop.f32.mrf.mxu0
    %v584 = vadd.f32 0.0, %v583
    %585 = vmatmul.f32.gmra.mxu0 %v543
    %v586 = vpop.f32.mrf.mxu0
    %v587 = vadd.f32 0.0, %v586
    %588 = vmatmul.f32.gmra.mxu0 %v546
    %v589 = vpop.f32.mrf.mxu0
    %v590 = vadd.f32 0.0, %v589
    %591 = vmatmul.f32.gmra.mxu0 %v548
    %v592 = vpop.f32.mrf.mxu0
    %v593 = vadd.f32 0.0, %v592
    %594 = vdwg.mxu0
    %599 = vrot.lane.b32.xlu0 %v584, 127
    %v600 = vpop.permute.xlu0 %599
    %601 = vrot.lane.b32.xlu0 %v587, 127
    %v602 = vpop.permute.xlu0 %601
    %603 = vrot.lane.b32.xlu0 %v590, 127
    %v604 = vpop.permute.xlu0 %603
    %605 = vrot.lane.b32.xlu0 %v593, 127
    %v606 = vpop.permute.xlu0 %605
    %611 = vxpose.xlu0.b32.start [1/16] %v600, 128
    %612 = vxpose.xlu0.b32.cont [2/16] %v602, 128
    %613 = vxpose.xlu0.b32.cont [3/16] %v604, 128
    %614 = vxpose.xlu0.b32.cont [4/16] %v606, 128
    %615 = vxpose.xlu0.b32.cont [5/16] 0.0, 128
    %616 = vxpose.xlu0.b32.cont [6/16] 0.0, 128
    %617 = vxpose.xlu0.b32.cont [7/16] 0.0, 128
    %618 = vxpose.xlu0.b32.cont [8/16] 0.0, 128
    %619 = vxpose.xlu0.b32.cont [9/16] 0.0, 128
    %620 = vxpose.xlu0.b32.cont [10/16] 0.0, 128
    %621 = vxpose.xlu0.b32.cont [11/16] 0.0, 128
    %622 = vxpose.xlu0.b32.cont [12/16] 0.0, 128
    %623 = vxpose.xlu0.b32.cont [13/16] 0.0, 128
    %624 = vxpose.xlu0.b32.cont [14/16] 0.0, 128
    %625 = vxpose.xlu0.b32.cont [15/16] 0.0, 128
    %626 = vxpose.xlu0.b32.end [16/16] 0.0, 128
    %v627 = vpop.trf.xlu0
    %v628 = vpop.trf.xlu0
    %v629 = vpop.trf.xlu0
    %v630 = vpop.trf.xlu0
    %v631 = vpop.trf.xlu0
    %v632 = vpop.trf.xlu0
    %v633 = vpop.trf.xlu0
    %v634 = vpop.trf.xlu0
    %v635 = vpop.trf.xlu0
    %v636 = vpop.trf.xlu0
    %v637 = vpop.trf.xlu0
    %v638 = vpop.trf.xlu0
    %v639 = vpop.trf.xlu0
    %v640 = vpop.trf.xlu0
    %v641 = vpop.trf.xlu0
    %v642 = vpop.trf.xlu0
    %643 = vset.pattern.permute.xlu0 0
    %644 = vperm.xlu0 %643, %v584
    %v645 = vpop.permute.xlu0 %644
    %647 = vset.pattern.permute.xlu0 0
    %648 = vperm.xlu0 %647, %v587
    %v649 = vpop.permute.xlu0 %648
    %651 = vset.pattern.permute.xlu0 0
    %652 = vperm.xlu0 %651, %v590
    %v653 = vpop.permute.xlu0 %652
    %655 = vset.pattern.permute.xlu0 0
    %656 = vperm.xlu0 %655, %v593
    %v657 = vpop.permute.xlu0 %656
    %v659 = vperm.slane %v627, 0
    %v660 = vadd.f32 %v645, %v659
    %v661 = vadd.f32 %v649, %v659
    %v662 = vadd.f32 %v653, %v659
    %v663 = vadd.f32 %v657, %v659
    %vm664 = vcmp.gt.f32.partialorder %v660, 0.0
    %vm665 = vcmp.gt.f32.partialorder %v661, 0.0
    %vm666 = vcmp.gt.f32.partialorder %v662, 0.0
    %vm667 = vcmp.gt.f32.partialorder %v663, 0.0
    %v668 = vmul.f32 %v660, 0.2
    %v669 = vmul.f32 %v661, 0.2
    %v670 = vmul.f32 %v662, 0.2
    %v671 = vmul.f32 %v663, 0.2
    %v672 = vsel %vm664, %v660, %v668
    %v673 = vsel %vm665, %v661, %v669
    %v674 = vsel %vm666, %v662, %v670
    %v675 = vsel %vm667, %v663, %v671
    %v676 = vadd.f32 %v672, %v35
    %v677 = vadd.f32 %v673, %v36
    %v678 = vadd.f32 %v674, %v37
    %v679 = vadd.f32 %v675, %v38
    %v680 = vsel %vm214, %v676, -inf
    %681 = vmax.xlane.f32.xlu0 %v680
    %v682 = vpop.xlane.xlu0 %681
    %v683 = vsel %vm214, %v677, -inf
    %684 = vmax.xlane.f32.xlu0 %v683
    %v685 = vpop.xlane.xlu0 %684
    %v686 = vsel %vm214, %v678, -inf
    %687 = vmax.xlane.f32.xlu0 %v686
    %v688 = vpop.xlane.xlu0 %687
    %v689 = vsel %vm214, %v679, -inf
    %690 = vmax.xlane.f32.xlu0 %v689
    %v691 = vpop.xlane.xlu0 %690
    %v692 = vsub.f32 %v676, %v682
    %v693 = vsub.f32 %v677, %v685
    %v694 = vsub.f32 %v678, %v688
    %v695 = vsub.f32 %v679, %v691
    %v696 = vmul.f32 %v692, 1.442695
    %v697 = vpow.pop %v696
    %v698 = vmul.f32 %v693, 1.442695
    %v699 = vpow.pop %v698
    %v700 = vmul.f32 %v694, 1.442695
    %v701 = vpow.pop %v700
    %v702 = vmul.f32 %v695, 1.442695
    %v703 = vpow.pop %v702
    %v704 = vsel %vm214, %v697, 0.0
    %705 = vadd.xlane.f32.xlu0 %v704
    %v706 = vpop.xlane.xlu0 %705
    %v707 = vsel %vm214, %v699, 0.0
    %708 = vadd.xlane.f32.xlu0 %v707
    %v709 = vpop.xlane.xlu0 %708
    %v710 = vsel %vm214, %v701, 0.0
    %711 = vadd.xlane.f32.xlu0 %v710
    %v712 = vpop.xlane.xlu0 %711
    %v713 = vsel %vm214, %v703, 0.0
    %714 = vadd.xlane.f32.xlu0 %v713
    %v715 = vpop.xlane.xlu0 %714
    %v716 = vrcp.pop %v706
    %v717 = vrcp.pop %v709
    %v718 = vrcp.pop %v712
    %v719 = vrcp.pop %v715
    %v720 = vmul.f32 %v697, %v716
    %v721 = vmul.f32 %v699, %v717
    %v722 = vmul.f32 %v701, %v718
    %v723 = vmul.f32 %v703, %v719
    %v724 = vpack.c.bf16 %v721, %v720
    %v725 = vpack.c.bf16 %v723, %v722
    %v726 = vpack.c.bf16 %v543, %v541
    %v727 = vpack.c.bf16 %v548, %v546
    %v728 = vld [vmem:[%s7] sm:$0x1]
    %v730 = vperm.slane %v728, 0
    %v733 = vsel %vm214, %v724, 0
    %v736 = vsel %vm214, %v725, 0
    %738 = vmatpush.bf16.msra.mxu0 0
    %739 = vmatpush.bf16.msra.mxu0 0
    %740 = vmatpush.bf16.msra.mxu0 0
    %741 = vmatpush.bf16.msra.mxu0 0
    %742 = vmatpush.bf16.msra.mxu0 0
    %743 = vmatpush.bf16.msra.mxu0 0
    %744 = vmatpush.bf16.msra.mxu0 %v727
    %745 = vmatpush.bf16.msra.mxu0 %v726
    %746 = vmatmul.bf16.gmra.mxu0 %v733
    %v747 = vpop.f32.mrf.mxu0
    %v748 = vadd.f32 %v730, %v747
    %v749 = vpop.f32.mrf.mxu0
    %v750 = vadd.f32 %v730, %v749
    %751 = vmatmul.bf16.gmra.mxu0 %v736
    %v752 = vpop.f32.mrf.mxu0
    %v753 = vadd.f32 %v730, %v752
    %v754 = vpop.f32.mrf.mxu0
    %v755 = vadd.f32 %v730, %v754
    %756 = vdwg.mxu0
    %757 = vst [vmem:[#allocation3] sm:$0xff] %v748
    %758 = vst [vmem:[#allocation3 + $0x8] sm:$0xff] %v750
    %759 = vst [vmem:[#allocation3 + $0x10] sm:$0xff] %v753
    %760 = vst [vmem:[#allocation3 + $0x18] sm:$0xff] %v755
    // Predicated region
    $region34: #{tpu_custom_call.1} parent=1 // pred_check
      _
    $region35: #{tpu_custom_call.1} parent=1 // pred_check_branch
      %762 = sbr.rel (0) target = $region37
    $region36: #{tpu_custom_call.1} parent=1 // pred_region
      %764 = vsyncadd [#allocation4], 0
      %s765 = sshll.u32 [#allocation3], 4
      %s766 = int_to_ptr.vmem [resolvable:$true] %s765
      %s767 = sshll.u32 %s8, 4
      %s768 = int_to_ptr.hbm [resolvable:$true] %s767
      %773 = dma.vmem_to_hbm [thread:$0]  %s766, 512, %s768, [#allocation4], 128, 128, 8
    $region37: #{tpu_custom_call.1} parent=1 // pred_fallthru
      _
    // Predicated region
    $region38: #{tpu_custom_call.1} parent=1 // pred_check
      _
    $region39: #{tpu_custom_call.1} parent=1 // pred_check_branch
      %775 = sbr.rel (0) target = $region41
    $region40: #{tpu_custom_call.1} parent=1 // pred_region
      %777 = dma.done [#allocation4], 512
    $region41: #{tpu_custom_call.1} parent=1 // pred_fallthru
      _
    %778 = vsyncpa [#allocation4], 1

</llo_original>
